<compile_context>
chip_gen: v6e
topology: v6e:2x2x1
jax: 0.10.0
libtpu: 0.0.40
codegen_flags: <defaults>
</compile_context>

<pallas_src>
import jax
import jax.numpy as jnp
import numpy as np
from jax.experimental import pallas as pl
from jax.experimental.pallas import tpu as pltpu


def _build_positional_table(d_model: int, max_len: int) -> jnp.ndarray:
    """Builds P of shape (1, max_len, d_model), matching the PyTorch init."""
    pos = np.arange(max_len, dtype=np.float32).reshape(-1, 1)
    div = np.power(
        10000.0, np.arange(0, d_model, 2, dtype=np.float32) / float(d_model)
    )
    X = pos / div  # (max_len, ceil(d_model/2))
    P = np.zeros((1, max_len, d_model), dtype=np.float32)
    n_sin = d_model // 2 + d_model % 2
    n_cos = d_model // 2
    P[:, :, 0::2] = np.sin(X[:, :n_sin])
    P[:, :, 1::2] = np.cos(X[:, :n_cos])
    return jnp.asarray(P)


def _pos_enc_kernel(x_ref, p_ref, o_ref):
    # x_ref / o_ref: (t_rows, lanes) tile of the current batch element
    # p_ref:         (t_rows, lanes) positional slice (constant across batch)
    o_ref[...] = (x_ref[...] + p_ref[...]).astype(o_ref.dtype)


# Budget (bytes) for live double-buffered tiles: 2x input + 2x output + 2x P.
_TILE_VMEM_BUDGET = 32 * 1024 * 1024
_VMEM_LIMIT_BYTES = 48 * 1024 * 1024


def _sublane_multiple(dtype) -> int:
    # f32 -> 8, bf16 -> 16, int8/fp8 -> 32 rows per packed sublane group.
    return max(8, 32 // jnp.dtype(dtype).itemsize)


def _choose_tile_rows(rows: int, row_bytes: int, sublane: int) -> int:
    """Largest row tile that keeps live buffers under budget and divides `rows`
    evenly (multiple of `sublane`), or the full `rows` extent."""
    max_rows = max(sublane, _TILE_VMEM_BUDGET // (6 * row_bytes))
    if rows <= max_rows:
        return rows
    t = (min(rows, max_rows) // sublane) * sublane
    while t >= sublane:
        if rows % t == 0:
            return t
        t -= sublane
    # No clean divisor: fall back to one full-row block per batch element.
    return rows


def positional_encoding_forward(x: jnp.ndarray, P: jnp.ndarray) -> jnp.ndarray:
    """x: (B, S, D).  Returns x + P[:, :S, :] (dropout p=0.0 => identity)."""
    B, S, D = x.shape
    p = P[0, :S, :].astype(x.dtype)  # (S, D); cast once so the add is single-dtype

    # Pick a lane-dense 2-D view (last dim a multiple of 128) when possible.
    if D % 128 == 0:
        rows, lanes = S, D
        x2, p2 = x, p
    elif (S * D) % 128 == 0:
        lanes = 128
        rows = (S * D) // lanes
        x2 = x.reshape(B, rows, lanes)
        p2 = p.reshape(rows, lanes)
    else:
        # Fallback: last dim equals the full array dim, so the (8,128) block
        # rule is still satisfied (edge stores may be masked).
        rows, lanes = S, D
        x2, p2 = x, p

    itemsize = jnp.dtype(x.dtype).itemsize
    sublane = _sublane_multiple(x.dtype)
    t_rows = _choose_tile_rows(rows, lanes * itemsize, sublane)
    n_row_tiles = rows // t_rows  # _choose_tile_rows always returns a divisor

    out = pl.pallas_call(
        _pos_enc_kernel,
        out_shape=jax.ShapeDtypeStruct((B, rows, lanes), x.dtype),
        grid_spec=pltpu.PrefetchScalarGridSpec(
            num_scalar_prefetch=0,
            # Batch innermost: P's block index only depends on the row-tile
            # axis, so the pipeline re-fetches P only when the row tile changes.
            grid=(n_row_tiles, B),
            in_specs=[
                pl.BlockSpec((pl.Squeezed(), t_rows, lanes),
                             lambda s, b: (b, s, 0)),
                pl.BlockSpec((t_rows, lanes), lambda s, b: (s, 0)),
            ],
            out_specs=pl.BlockSpec((pl.Squeezed(), t_rows, lanes),
                                   lambda s, b: (b, s, 0)),
        ),
        compiler_params=pltpu.CompilerParams(
            dimension_semantics=("parallel", "parallel"),
            vmem_limit_bytes=_VMEM_LIMIT_BYTES,
        ),
    )(x2, p2)

    return out.reshape(B, S, D)


if __name__ == "__main__":
    # Small shapes consistent with the module: batch=2, seq=8, d_model=32.
    B, S, D = 2, 8, 32
    max_len = 1000

    key = jax.random.PRNGKey(0)
    x = jax.random.normal(key, (B, S, D), dtype=jnp.float32)

    P = _build_positional_table(d_model=D, max_len=max_len)

    fwd = jax.jit(positional_encoding_forward)
    out = jax.block_until_ready(fwd(x, P))

    # Reference check in plain JAX (dropout p=0.0 is identity).
    ref = x + P[:, :S, :].astype(x.dtype)
    np.testing.assert_allclose(np.asarray(out), np.asarray(ref), rtol=1e-6, atol=1e-6)

    print("KERNEL_OK")
</pallas_src>

<mosaic_0001>
module attributes {stable_mosaic.version = 11 : i64} {
  func.func @_pos_enc_kernel(%arg0: i32, %arg1: i32, %arg2: memref<1x2x128xf32, #tpu.memory_space<vmem>>, %arg3: memref<2x128xf32, #tpu.memory_space<vmem>>, %arg4: memref<1x2x128xf32, #tpu.memory_space<vmem>>) attributes {dimension_semantics = [#tpu.dimension_semantics<parallel>, #tpu.dimension_semantics<parallel>], iteration_bounds = array<i64: 1, 2>, scalar_prefetch = 0 : i64, scratch_operands = 0 : i64, tpu.core_type = #tpu.core_type<tc>, window_params = [{transform_indices = @transform_0, window_bounds = array<i64: 1, 2, 128>}, {transform_indices = @transform_1, window_bounds = array<i64: 2, 128>}, {transform_indices = @transform_2, window_bounds = array<i64: 1, 2, 128>}]} {
    %c0 = arith.constant 0 : index
    %c0_0 = arith.constant 0 : index
    %c0_1 = arith.constant 0 : index
    %0 = vector.load %arg2[%c0, %c0_0, %c0_1] : memref<1x2x128xf32, #tpu.memory_space<vmem>>, vector<1x2x128xf32>
    %1 = vector.shape_cast %0 : vector<1x2x128xf32> to vector<2x128xf32>
    %c0_2 = arith.constant 0 : index
    %c0_3 = arith.constant 0 : index
    %2 = vector.load %arg3[%c0_2, %c0_3] : memref<2x128xf32, #tpu.memory_space<vmem>>, vector<2x128xf32>
    %3 = arith.addf %1, %2 : vector<2x128xf32>
    %c0_4 = arith.constant 0 : index
    %c0_5 = arith.constant 0 : index
    %c0_6 = arith.constant 0 : index
    %4 = vector.load %arg4[%c0_4, %c0_5, %c0_6] : memref<1x2x128xf32, #tpu.memory_space<vmem>>, vector<1x2x128xf32>
    %5 = vector.shape_cast %4 : vector<1x2x128xf32> to vector<2x128xf32>
    %6 = vector.shape_cast %3 : vector<2x128xf32> to vector<1x2x128xf32>
    tpu.vector_store %arg4[%c0_4, %c0_5, %c0_6], %6 {strides = array<i32>} : memref<1x2x128xf32, #tpu.memory_space<vmem>>, vector<1x2x128xf32>,
    return
  }
  func.func @transform_0(%arg0: i32, %arg1: i32) -> (i32, i32, i32) {
    %c0_i32 = arith.constant 0 : i32
    %c0_i32_0 = arith.constant 0 : i32
    return %arg1, %arg0, %c0_i32 : i32, i32, i32
  }
  func.func @transform_1(%arg0: i32, %arg1: i32) -> (i32, i32) {
    %c0_i32 = arith.constant 0 : i32
    %c0_i32_0 = arith.constant 0 : i32
    return %arg0, %c0_i32 : i32, i32
  }
  func.func @transform_2(%arg0: i32, %arg1: i32) -> (i32, i32, i32) {
    %c0_i32 = arith.constant 0 : i32
    %c0_i32_0 = arith.constant 0 : i32
    return %arg1, %arg0, %c0_i32 : i32, i32, i32
  }
}

</mosaic_0001>

<llo_original>
// kernel: squeeze.1
$region0: #{squeeze.1}
  %s0 = inlined_call_operand.vmem [shape: f32[1,8,32], index: 0, kind: input, shape index: {}]
  %s1 = inlined_call_operand.vmem [shape: f32[2,128], index: 1, kind: output, shape index: {}]
  $region1: #{squeeze.1} parent=0
    #allocation0 [shape = 'u8[4096]{0}', space=vmem, size = 0x1000, scoped, tag = 'scoped mem for output reshape']
    %s2 = smov 3
    %v3 = vld [vmem:[%s0] ss:$4 sm:%s2]
    %vm4 = vcmask 261120
    %5 = vst.msk [vmem:[#allocation0] sm:$0x3] %vm4, %v3
    %s6 = scalar_lea.vmem %s0, 3
    %s7 = smov 3
    %v8 = vld [vmem:[%s6] ss:$4 sm:%s7]
    %9 = vrot.lane.b32.xlu0 %v8, 96
    %v10 = vpop.permute.xlu0 %9
    %vm11 = vcmask 1048320
    %12 = vst.msk [vmem:[#allocation0] sm:$0x3] %vm11, %v10
    %s13 = scalar_lea.vmem %s0, 2
    %s14 = smov 3
    %v15 = vld [vmem:[%s13] ss:$4 sm:%s14]
    %16 = vrot.lane.b32.xlu0 %v15, 64
    %v17 = vpop.permute.xlu0 %16
    %vm18 = vcmask 785920
    %19 = vst.msk [vmem:[#allocation0] sm:$0x3] %vm18, %v17
    %s20 = scalar_lea.vmem %s0, 1
    %s21 = smov 3
    %v22 = vld [vmem:[%s20] ss:$4 sm:%s21]
    %23 = vrot.lane.b32.xlu0 %v22, 32
    %v24 = vpop.permute.xlu0 %23
    %vm25 = vcmask 523520
    %26 = vst.msk [vmem:[#allocation0] sm:$0x3] %vm25, %v24
    %s28 = sshll.u32 1, 2
    %s29 = ssub.s32 %s28, 1
    %v31 = vld [vmem:[#allocation0] sm:%s29]
    %s32 = sshll.u32 1, 2
    %s33 = ssub.s32 %s32, 1
    %34 = vst [vmem:[%s1] sm:%s33] %v31

// kernel: positional_encoding_forward.1
$region0: #{positional_encoding_forward.1}
  #allocation0 [shape = 'u32[]', space=smem, size = 0x4, offset = 0x4, fixed_abs, tag = 'smem constant byte address 0x4 - core index']
  #allocation1 [shape = 'u32[144,128]{1,0:T(1,128)}', space=vmem, size = 0x12000, scoped, tag = 'internal scratch']
  %s0 = inlined_call_operand.vmem [shape: f32[2,2,128], index: 0, kind: input, shape index: {}]
  %s1 = inlined_call_operand.vmem [shape: f32[2,128], index: 1, kind: input, shape index: {}]
  %s2 = inlined_call_operand.vmem [shape: f32[2,2,128], index: 2, kind: output, shape index: {}]
  %s3 = sld [smem:[#allocation0]]
  $region41: #{positional_encoding_forward.1} parent=0
    _
  %s5 = ssub.s32 1, %s3
  %s6 = scalar_select 0, %s5, %s3
  loop: start=0, step=1, limit=4
  $region2: #{positional_encoding_forward.1} parent=0 // loop_pre_header
    _
  $region3: #{positional_encoding_forward.1} parent=0 // loop_header
    %s8 = sphi 0, %s12
    %p9 = scmp.ge.s32.totalorder %s8, 4
    %s15 = sphi 0, %s27
    %s16 = sphi 0, %s23
    %s17 = sphi 0, %s15
    %s18 = sphi 0, %s16
    %s19 = sphi 0, %s17
    %s20 = sphi 0, %s18
    %s32 = sphi 0, %s34
    %s35 = sphi 0, %s32
    %s36 = sphi 0, %s35
    %s52 = sphi 0, %s36
    %s58 = sphi 0, %s60
    %s61 = sphi 0, %s58
    %s62 = sphi 0, %s61
    %s78 = sphi 0, %s62
    %s86 = sphi 0, %s88
    %s89 = sphi 0, %s86
    %s90 = sphi 0, %s89
    %s106 = sphi 0, %s90
  $region4: #{positional_encoding_forward.1} parent=0 // loop_header_branch
    %11 = sbr.rel (%p9) target = $region8
  $region5: #{positional_encoding_forward.1} parent=0 // loop_body
    %s13 = ssub.s32 %s8, 1
    %s14 = ssub.s32 %s8, 2
    %s21 = sadd.s32 1, %s16
    %p22 = scmp.ge.s32.totalorder %s21, 2
    %s23 = scalar_select %p22, 0, %s21
    %s24 = sadd.s32 1, %s15
    %s25 = scalar_select %p22, %s24, %s15
    %p26 = scmp.ge.s32.totalorder %s25, 1
    %s27 = scalar_select %p26, 0, %s25
    %s28 = ssub.s32 %s16, %s23
    %s29 = ssub.s32 %s15, %s27
    %s30 = sor.u32 %s28, %s29
    %p31 = scmp.eq.s32.totalorder %s30, 0
    %s33 = sadd.s32 %s32, 1
    %s34 = scalar_select %p31, %s32, %s33
    %p37 = pneg %p31
    %p38 = scmp.eq.s32.totalorder %s8, 1
    %p39 = por %p37, %p38
    %p40 = scmp.ne.s32.totalorder %s32, %s35
    %p41 = scmp.eq.s32.totalorder %s8, 0
    %p42 = por %p40, %p41
    %p43 = scmp.ne.s32.totalorder %s32, %s35
    %p44 = scmp.eq.s32.totalorder %s13, 1
    %p45 = por %p43, %p44
    %p46 = scmp.ne.s32.totalorder %s35, %s36
    %p47 = scmp.eq.s32.totalorder %s13, 0
    %p48 = por %p46, %p47
    %p49 = scmp.ne.s32.totalorder %s35, %s36
    %p50 = scmp.eq.s32.totalorder %s14, 1
    %p51 = por %p49, %p50
    %p53 = scmp.ne.s32.totalorder %s36, %s52
    %p54 = scmp.eq.s32.totalorder %s14, 0
    %p55 = por %p53, %p54
    %s56 = ssub.s32 %s15, %s27
    %p57 = scmp.eq.s32.totalorder %s56, 0
    %s59 = sadd.s32 %s58, 1
    %s60 = scalar_select %p57, %s58, %s59
    %p63 = pneg %p57
    %p64 = scmp.eq.s32.totalorder %s8, 1
    %p65 = por %p63, %p64
    %p66 = scmp.ne.s32.totalorder %s58, %s61
    %p67 = scmp.eq.s32.totalorder %s8, 0
    %p68 = por %p66, %p67
    %p69 = scmp.ne.s32.totalorder %s58, %s61
    %p70 = scmp.eq.s32.totalorder %s13, 1
    %p71 = por %p69, %p70
    %p72 = scmp.ne.s32.totalorder %s61, %s62
    %p73 = scmp.eq.s32.totalorder %s13, 0
    %p74 = por %p72, %p73
    %p75 = scmp.ne.s32.totalorder %s61, %s62
    %p76 = scmp.eq.s32.totalorder %s14, 1
    %p77 = por %p75, %p76
    %p79 = scmp.ne.s32.totalorder %s62, %s78
    %p80 = scmp.eq.s32.totalorder %s14, 0
    %p81 = por %p79, %p80
    %s82 = ssub.s32 %s16, %s23
    %s83 = ssub.s32 %s15, %s27
    %s84 = sor.u32 %s82, %s83
    %p85 = scmp.eq.s32.totalorder %s84, 0
    %s87 = sadd.s32 %s86, 1
    %s88 = scalar_select %p85, %s86, %s87
    %p91 = pneg %p85
    %p92 = scmp.eq.s32.totalorder %s8, 1
    %p93 = por %p91, %p92
    %p94 = scmp.ne.s32.totalorder %s86, %s89
    %p95 = scmp.eq.s32.totalorder %s8, 0
    %p96 = por %p94, %p95
    %p97 = scmp.ne.s32.totalorder %s86, %s89
    %p98 = scmp.eq.s32.totalorder %s13, 1
    %p99 = por %p97, %p98
    %p100 = scmp.ne.s32.totalorder %s89, %s90
    %p101 = scmp.eq.s32.totalorder %s13, 0
    %p102 = por %p100, %p101
    %p103 = scmp.ne.s32.totalorder %s89, %s90
    %p104 = scmp.eq.s32.totalorder %s14, 1
    %p105 = por %p103, %p104
    %p107 = scmp.ne.s32.totalorder %s90, %s106
    %p108 = scmp.eq.s32.totalorder %s14, 0
    %p109 = por %p107, %p108
    %p110 = scmp.le.s32.totalorder 1, %s8
    %p111 = scmp.lt.s32.totalorder %s8, 3
    %p112 = pnand %p110, %p111
    %p113 = pneg %p112
    // Predicated region
    $region9: #{positional_encoding_forward.1} parent=5 // pred_check
      _
    $region10: #{positional_encoding_forward.1} parent=5 // pred_check_branch
      %115 = sbr.rel (%p112) target = $region12
    $region11: #{positional_encoding_forward.1} parent=5 // pred_region
      %s116 = ssub.s32 %s8, 1
      // Predicated region
      $region13: #{positional_encoding_forward.1} parent=11 // pred_check
        %p117 = pneg %p74
      $region14: #{positional_encoding_forward.1} parent=11 // pred_check_branch
        %119 = sbr.rel (%p117) target = $region16
      $region15: #{positional_encoding_forward.1} parent=11 // pred_region
        %p120 = scmp.lt.s32.totalorder %s17, 0
        %s121 = scalar_select %p120, %s17, 0
        %s122 = smul.addr %s121, 2
        %s123 = scalar_lea.vmem %s1, %s122
      $region16: #{positional_encoding_forward.1} parent=11 // pred_fallthru
        _
    $region12: #{positional_encoding_forward.1} parent=5 // pred_fallthru
      _
    %p124 = scmp.lt.s32.totalorder %s8, 2
    // Predicated region
    $region17: #{positional_encoding_forward.1} parent=5 // pred_check
      %p125 = pneg %p124
    $region18: #{positional_encoding_forward.1} parent=5 // pred_check_branch
      %127 = sbr.rel (%p125) target = $region20
    $region19: #{positional_encoding_forward.1} parent=5 // pred_region
      // Predicated region
      $region21: #{positional_encoding_forward.1} parent=19 // pred_check
        %p128 = pneg %p42
      $region22: #{positional_encoding_forward.1} parent=19 // pred_check_branch
        %130 = sbr.rel (%p128) target = $region24
      $region23: #{positional_encoding_forward.1} parent=19 // pred_region
        %p131 = scmp.lt.s32.totalorder %s16, 1
        %s132 = scalar_select %p131, %s16, 1
        %p133 = scmp.lt.s32.totalorder %s15, 0
        %s134 = scalar_select %p133, %s15, 0
        %s135 = sadd.s32 %s134, %s132
        %s136 = smul.addr %s135, 2
        %s137 = scalar_lea.vmem %s0, %s136
      $region24: #{positional_encoding_forward.1} parent=19 // pred_fallthru
        _
    $region20: #{positional_encoding_forward.1} parent=5 // pred_fallthru
      _
    %p138 = scmp.le.s32.totalorder 1, %s8
    %p139 = scmp.lt.s32.totalorder %s8, 3
    %p140 = pnand %p138, %p139
    %p141 = pneg %p140
    // Predicated region
    $region25: #{positional_encoding_forward.1} parent=5 // pred_check
      _
    $region26: #{positional_encoding_forward.1} parent=5 // pred_check_branch
      %143 = sbr.rel (%p140) target = $region28
    $region27: #{positional_encoding_forward.1} parent=5 // pred_region
      %s144 = ssub.s32 %s8, 1
      %p145 = scmp.lt.s32.totalorder %s18, 1
      %s146 = scalar_select %p145, %s18, 1
      %p147 = scmp.lt.s32.totalorder %s17, 0
      %s148 = scalar_select %p147, %s17, 0
      %s149 = sadd.s32 %s148, %s146
      %s150 = smul.addr %s149, 2
      %s151 = scalar_lea.vmem %s0, %s150
      %p152 = pneg %p48
      %p153 = pneg %p45
      %p154 = scmp.lt.s32.totalorder %s17, 0
      %s155 = scalar_select %p154, %s17, 0
      %s156 = smul.addr %s155, 2
      %s157 = scalar_lea.vmem %s1, %s156
      %p158 = pneg %p74
      %p159 = pneg %p71
      %p160 = pneg %p102
      %p161 = pneg %p99
      %p162 = scmp.lt.s32.totalorder %s18, 1
      %s163 = scalar_select %p162, %s18, 1
      %p164 = scmp.lt.s32.totalorder %s17, 0
      %s165 = scalar_select %p164, %s17, 0
      %s166 = sadd.s32 %s165, %s163
      %s167 = smul.addr %s166, 2
      %s168 = scalar_lea.vmem %s2, %s167
      %p169 = scmp.lt.s32.totalorder %s18, 1
      %s170 = scalar_select %p169, %s18, 1
      %p171 = scmp.lt.s32.totalorder %s17, 0
      %s172 = scalar_select %p171, %s17, 0
      %s173 = sadd.s32 %s172, %s170
      %s174 = smul.addr %s173, 2
      %s175 = scalar_lea.vmem %s0, %s174
      %p176 = scmp.lt.s32.totalorder %s17, 0
      %s177 = scalar_select %p176, %s17, 0
      %s178 = smul.addr %s177, 2
      %s179 = scalar_lea.vmem %s1, %s178
      %p180 = scmp.lt.s32.totalorder %s18, 1
      %s181 = scalar_select %p180, %s18, 1
      %p182 = scmp.lt.s32.totalorder %s17, 0
      %s183 = scalar_select %p182, %s17, 0
      %s184 = sadd.s32 %s183, %s181
      %s185 = smul.addr %s184, 2
      %s186 = scalar_lea.vmem %s2, %s185
      %v187 = vld [vmem:[%s175] sm:$0x3]
      %v188 = vld [vmem:[%s179] sm:$0x3]
      %v189 = vadd.f32 %v187, %v188
      %190 = vst [vmem:[%s186] sm:$0x3] %v189
      %p191 = scmp.lt.s32.totalorder %s18, 1
      %s192 = scalar_select %p191, %s18, 1
      %p193 = scmp.lt.s32.totalorder %s17, 0
      %s194 = scalar_select %p193, %s17, 0
      %s195 = sadd.s32 %s194, %s192
      %s196 = smul.addr %s195, 2
      %s197 = scalar_lea.vmem %s2, %s196
      // Predicated region
      $region29: #{positional_encoding_forward.1} parent=27 // pred_check
        %p198 = pneg %p99
      $region30: #{positional_encoding_forward.1} parent=27 // pred_check_branch
        %200 = sbr.rel (%p198) target = $region32
      $region31: #{positional_encoding_forward.1} parent=27 // pred_region
        _
      $region32: #{positional_encoding_forward.1} parent=27 // pred_fallthru
        _
    $region28: #{positional_encoding_forward.1} parent=5 // pred_fallthru
      _
    %p201 = scmp.le.s32.totalorder 2, %s8
    // Predicated region
    $region33: #{positional_encoding_forward.1} parent=5 // pred_check
      %p202 = pneg %p201
    $region34: #{positional_encoding_forward.1} parent=5 // pred_check_branch
      %204 = sbr.rel (%p202) target = $region36
    $region35: #{positional_encoding_forward.1} parent=5 // pred_region
      %s205 = ssub.s32 %s8, 2
      // Predicated region
      $region37: #{positional_encoding_forward.1} parent=35 // pred_check
        %p206 = pneg %p105
      $region38: #{positional_encoding_forward.1} parent=35 // pred_check_branch
        %208 = sbr.rel (%p206) target = $region40
      $region39: #{positional_encoding_forward.1} parent=35 // pred_region
        %p209 = scmp.lt.s32.totalorder %s20, 1
        %s210 = scalar_select %p209, %s20, 1
        %p211 = scmp.lt.s32.totalorder %s19, 0
        %s212 = scalar_select %p211, %s19, 0
        %s213 = sadd.s32 %s212, %s210
        %s214 = smul.addr %s213, 2
        %s215 = scalar_lea.vmem %s2, %s214
      $region40: #{positional_encoding_forward.1} parent=35 // pred_fallthru
        _
    $region36: #{positional_encoding_forward.1} parent=5 // pred_fallthru
      _
  $region6: #{positional_encoding_forward.1} parent=0 // loop_footer
    %s12 = sadd.s32 1, %s8
  $region7: #{positional_encoding_forward.1} parent=0 // loop_footer_branch
    %7 = sbr.rel target = $region3
  $region8: #{positional_encoding_forward.1} parent=0 // loop_exit
    _

</llo_original>
